<compile_context>
chip_gen: v5e
topology: v5e:2x2
jax: 0.10.0
libtpu: 0.0.40
codegen_flags: <defaults>
</compile_context>

<pallas_src>
import functools
import math

import jax
import jax.numpy as jnp
from jax.experimental import pallas as pl
from jax.experimental.pallas import tpu as pltpu


# ------------------------------ VMEM budgeting ------------------------------


def _vmem_limit(block_bytes, headroom=8 << 20, floor=16 << 20, cap=64 << 20):
    """Scoped-VMEM budget from actual block bytes + headroom (v7x has 64 MiB)."""
    return int(max(floor, min(block_bytes + headroom, cap)))


# --------------------------- tiled linear (matmul) ---------------------------


def _matmul_kernel(x_ref, w_ref, o_ref, acc_ref):
    @pl.when(pl.program_id(2) == 0)
    def _():
        acc_ref[...] = jnp.zeros_like(acc_ref)

    # bf16 operands into the MXU, f32 accumulate.
    acc_ref[...] += jnp.dot(x_ref[...].astype(jnp.bfloat16),
                            w_ref[...].astype(jnp.bfloat16),
                            preferred_element_type=jnp.float32)

    @pl.when(pl.program_id(2) == pl.num_programs(2) - 1)
    def _():
        o_ref[...] = acc_ref[...].astype(o_ref.dtype)


def _matmul_bias_kernel(x_ref, w_ref, b_ref, o_ref, acc_ref):
    @pl.when(pl.program_id(2) == 0)
    def _():
        acc_ref[...] = jnp.zeros_like(acc_ref)

    acc_ref[...] += jnp.dot(x_ref[...].astype(jnp.bfloat16),
                            w_ref[...].astype(jnp.bfloat16),
                            preferred_element_type=jnp.float32)

    @pl.when(pl.program_id(2) == pl.num_programs(2) - 1)
    def _():
        o_ref[...] = (acc_ref[...]
                      + b_ref[...].astype(jnp.float32)).astype(o_ref.dtype)


def _fit_tile(dim, preferred):
    """Largest MXU-friendly tile dividing `dim`; falls back to the full dim."""
    if dim >= preferred and dim % preferred == 0:
        return preferred
    t = (min(dim, preferred) // 128) * 128
    while t >= 128:
        if dim % t == 0:
            return t
        t -= 128
    return dim


def linear(x, w, b=None, *, tm=256, tn=256, tk=512):
    """x:(M,K) @ w:(K,N) [+ b:(N,)] via a tiled, double-buffered Pallas matmul.

    Defaults target v6e/v7x (on v6e's 128 MiB VMEM tm=tn=512 is also viable);
    the fallback in _fit_tile produces 128-granular tiles, which is what v5e
    wants anyway.  Pass w pre-cast to bf16 to halve weight HBM traffic.
    """
    M, K = x.shape
    Kw, N = w.shape
    assert K == Kw
    tm, tn, tk = _fit_tile(M, tm), _fit_tile(N, tn), _fit_tile(K, tk)
    grid = (M // tm, N // tn, K // tk)

    in_specs = [
        pl.BlockSpec((tm, tk), lambda i, j, k: (i, k)),
        pl.BlockSpec((tk, tn), lambda i, j, k: (k, j)),
    ]
    operands = [x, w]
    kernel = _matmul_kernel
    # double-buffered input/output blocks + f32 accumulator
    blk_bytes = (2 * (tm * tk * x.dtype.itemsize
                      + tk * tn * w.dtype.itemsize
                      + tm * tn * x.dtype.itemsize)
                 + tm * tn * 4)
    if b is not None:
        in_specs.append(pl.BlockSpec((1, tn), lambda i, j, k: (0, j)))
        operands.append(b.reshape(1, N))
        kernel = _matmul_bias_kernel
        blk_bytes += 2 * tn * b.dtype.itemsize

    return pl.pallas_call(
        kernel,
        out_shape=jax.ShapeDtypeStruct((M, N), x.dtype),
        grid=grid,
        in_specs=in_specs,
        out_specs=pl.BlockSpec((tm, tn), lambda i, j, k: (i, j)),
        scratch_shapes=[pltpu.VMEM((tm, tn), jnp.float32)],
        compiler_params=pltpu.CompilerParams(
            dimension_semantics=("parallel", "parallel", "arbitrary"),
            vmem_limit_bytes=_vmem_limit(blk_bytes)),
    )(*operands)


# ------------------- fused RMSNorm + RoPE + SDPA (per batch) ------------------


def _attn_kernel(qkv_ref, qw_ref, kw_ref, cos_ref, sin_ref, o_ref,
                 *, n_heads, d_head, eps):
    # qkv_ref: (N, 3*D) for one batch element (D = n_heads * d_head)
    # qw/kw:   (1, d_head)  -- q weight already carries the 1/sqrt(d_head) scale
    # cos/sin: (N, d_head)  -- f32 tables, rotate-half sign baked into sin
    # o_ref:   (N, D)       -- merged-head, lane-dense output
    D = n_heads * d_head
    half = d_head // 2
    N = o_ref.shape[0]

    cos = cos_ref[...]
    sin = sin_ref[...]
    # Hoist the (1, d_head) -> (N, d_head) broadcasts out of the head loop
    # (JAX does not CSE broadcast_in_dim).
    qw = jnp.broadcast_to(qw_ref[...].astype(jnp.float32), (N, d_head))
    kw = jnp.broadcast_to(kw_ref[...].astype(jnp.float32), (N, d_head))

    def rms_rope(x, w):
        ms = jnp.mean(x * x, axis=-1, keepdims=True)
        xn = x * jax.lax.rsqrt(ms + eps) * w
        # rotate-half; the -1 sign of the first half lives in the sin table.
        rolled = jnp.concatenate([xn[:, half:], xn[:, :half]], axis=-1)
        return (xn * cos + rolled * sin).astype(jnp.bfloat16)

    # contract last dims of q and k directly (q @ k^T without an XLU transpose)
    nt_dims = (((1,), (1,)), ((), ()))

    for h in range(n_heads):  # all heads of this batch element in one grid step
        lo = h * d_head
        # Slice the ref per head -- data is already VMEM-resident, no slab load.
        q = qkv_ref[:, lo:lo + d_head].astype(jnp.float32)
        k = qkv_ref[:, D + lo:D + lo + d_head].astype(jnp.float32)
        v = qkv_ref[:, 2 * D + lo:2 * D + lo + d_head].astype(jnp.bfloat16)

        q_bf = rms_rope(q, qw)   # attention scale already folded into qw
        k_bf = rms_rope(k, kw)

        s = jax.lax.dot_general(q_bf, k_bf, nt_dims,
                                preferred_element_type=jnp.float32)
        p = jnp.exp(s - jnp.max(s, axis=-1, keepdims=True))
        l = jnp.sum(p, axis=-1, keepdims=True)
        o = jnp.dot(p.astype(jnp.bfloat16), v,
                    preferred_element_type=jnp.float32)
        # Normalize the (N, d_head) output, not the (N, N) probabilities.
        o = o * pl.reciprocal(l, approx=True)
        # Per-head lane-dense store into the merged "n (h d)" layout.
        o_ref[:, lo:lo + d_head] = o.astype(o_ref.dtype)


def fused_attention(qkv, q_norm_w_scaled, k_norm_w, cos, sin_signed,
                    *, n_heads, out_dtype):
    """qkv: (B, N, 3*D). Returns attention output in (B, N, D) merged layout."""
    B, N, three_d = qkv.shape
    D = three_d // 3
    d_head = D // n_heads
    kern = functools.partial(_attn_kernel, n_heads=n_heads, d_head=d_head,
                             eps=1e-6)
    # VMEM budget: double-buffered qkv/out blocks + tables + per-head temporaries.
    blk_bytes = (2 * (N * three_d * qkv.dtype.itemsize
                      + N * D * jnp.dtype(out_dtype).itemsize)
                 + 4 * N * d_head * 4
                 + 4 * N * N * 4
                 + 8 * N * d_head * 4)
    return pl.pallas_call(
        kern,
        out_shape=jax.ShapeDtypeStruct((B, N, D), out_dtype),
        grid=(B,),
        in_specs=[
            pl.BlockSpec((None, N, three_d), lambda b: (b, 0, 0)),   # qkv slab
            pl.BlockSpec((1, d_head), lambda b: (0, 0)),             # q norm w * scale
            pl.BlockSpec((1, d_head), lambda b: (0, 0)),             # k norm w
            pl.BlockSpec((N, d_head), lambda b: (0, 0)),             # rope cos
            pl.BlockSpec((N, d_head), lambda b: (0, 0)),             # rope sin (signed)
        ],
        out_specs=pl.BlockSpec((None, N, D), lambda b: (b, 0, 0)),
        compiler_params=pltpu.CompilerParams(
            dimension_semantics=("parallel",),
            vmem_limit_bytes=_vmem_limit(blk_bytes)),
    )(qkv, q_norm_w_scaled.reshape(1, d_head), k_norm_w.reshape(1, d_head),
      cos, sin_signed)


# ------------------------------- glue (JAX) --------------------------------


def rope_tables(n, d):
    """Standard rotate-half RoPE tables (theta=10000), always f32."""
    half = d // 2
    inv_freq = 1.0 / (10000.0 ** (jnp.arange(half, dtype=jnp.float32) / half))
    ang = jnp.arange(n, dtype=jnp.float32)[:, None] * inv_freq[None, :]
    cos = jnp.concatenate([jnp.cos(ang), jnp.cos(ang)], axis=-1)
    sin = jnp.concatenate([jnp.sin(ang), jnp.sin(ang)], axis=-1)
    return cos, sin


def init_params(key, d_model, n_heads):
    dh = d_model // n_heads
    k1, k2, k3 = jax.random.split(key, 3)
    return {
        "n_heads": n_heads,
        "w_qkv": (jax.random.normal(k1, (d_model, 3 * d_model), jnp.float32) * 0.02),
        "w_out": (jax.random.normal(k2, (d_model, d_model), jnp.float32) * 0.02),
        "b_out": (jax.random.normal(k3, (d_model,), jnp.float32) * 0.02),
        "q_norm_w": jnp.ones((dh,), jnp.float32),
        "k_norm_w": jnp.ones((dh,), jnp.float32),
    }


def attn_forward(x, params):
    B, N, D = x.shape
    H = params["n_heads"]
    Dh = D // H

    # Pre-cast weights to bf16 once (halves weight HBM traffic; kernels keep
    # an f32 accumulator via preferred_element_type).
    w_qkv_bf = params["w_qkv"].astype(jnp.bfloat16)
    w_out_bf = params["w_out"].astype(jnp.bfloat16)

    # qkv projection (tiled Pallas matmul, no bias)
    qkv = linear(x.reshape(B * N, D), w_qkv_bf)
    qkv = qkv.reshape(B, N, 3 * D)

    cos, sin = rope_tables(N, Dh)
    # bake the rotate-half sign into the sin table (avoids the negate pass)
    sin_signed = jnp.concatenate([-sin[:, :Dh // 2], sin[:, Dh // 2:]], axis=-1)
    # fold the 1/sqrt(Dh) attention scale into the q-norm weight (RoPE is linear)
    q_norm_w_scaled = params["q_norm_w"] * (1.0 / math.sqrt(Dh))

    # fused RMSNorm + RoPE + SDPA; output already in merged "b n (h d)" layout
    attn_out = fused_attention(qkv, q_norm_w_scaled, params["k_norm_w"],
                               cos, sin_signed, n_heads=H, out_dtype=x.dtype)

    # output projection (tiled Pallas matmul + bias); no transpose needed
    out = linear(attn_out.reshape(B * N, D), w_out_bf, params["b_out"])
    return out.reshape(B, N, D)


# ------------------------------ pure-JAX ref --------------------------------


def attn_reference(x, params):
    B, N, D = x.shape
    H = params["n_heads"]
    Dh = D // H
    qkv = x.reshape(B * N, D) @ params["w_qkv"]
    qkv = qkv.reshape(B, N, 3 * D)
    q, k, v = qkv[..., :D], qkv[..., D:2 * D], qkv[..., 2 * D:]

    def split_heads(t):
        return t.reshape(B, N, H, Dh).transpose(0, 2, 1, 3)

    q, k, v = split_heads(q), split_heads(k), split_heads(v)

    def rms(t, w):
        ms = jnp.mean(t * t, axis=-1, keepdims=True)
        return t * jax.lax.rsqrt(ms + 1e-6) * w

    q = rms(q, params["q_norm_w"])
    k = rms(k, params["k_norm_w"])

    cos, sin = rope_tables(N, Dh)

    def rope(t):
        d = t.shape[-1] // 2
        rot = jnp.concatenate([-t[..., d:], t[..., :d]], axis=-1)
        return t * cos + rot * sin

    q = rope(q).astype(jnp.bfloat16)
    k = rope(k).astype(jnp.bfloat16)
    v = v.astype(jnp.bfloat16)

    s = jnp.einsum("bhqd,bhkd->bhqk", q, k,
                   preferred_element_type=jnp.float32) / math.sqrt(Dh)
    p = jax.nn.softmax(s, axis=-1)
    o = jnp.einsum("bhqk,bhkd->bhqd", p.astype(jnp.bfloat16), v,
                   preferred_element_type=jnp.float32)
    merged = o.transpose(0, 2, 1, 3).reshape(B * N, D)
    return (merged @ params["w_out"] + params["b_out"]).reshape(B, N, D)


# ---------------------------------- main ------------------------------------


if __name__ == "__main__":
    B, N, D, H = 2, 16, 64, 4   # batch, seq, d_model, n_heads  (Dh = 16)

    key = jax.random.PRNGKey(0)
    kx, kp = jax.random.split(key)
    x = jax.random.normal(kx, (B, N, D), jnp.float32)
    params = init_params(kp, D, H)

    out = attn_forward(x, params)
    out = jax.block_until_ready(out)

    ref = attn_reference(x, params)
    assert out.shape == (B, N, D)
    assert jnp.allclose(out, ref, atol=5e-2, rtol=5e-2), "mismatch vs reference"

    print("KERNEL_OK")
</pallas_src>

<mosaic_0001>
module attributes {stable_mosaic.version = 11 : i64} {
  func.func @_matmul_kernel(%arg0: i32, %arg1: i32, %arg2: i32, %arg3: memref<32x64xf32, #tpu.memory_space<vmem>>, %arg4: memref<64x192xbf16, #tpu.memory_space<vmem>>, %arg5: memref<32x192xf32, #tpu.memory_space<vmem>>, %arg6: memref<32x192xf32, #tpu.memory_space<vmem>>) attributes {dimension_semantics = [#tpu.dimension_semantics<parallel>, #tpu.dimension_semantics<parallel>, #tpu.dimension_semantics<arbitrary>], iteration_bounds = array<i64: 1, 1, 1>, scalar_prefetch = 0 : i64, scratch_operands = 1 : i64, tpu.core_type = #tpu.core_type<tc>, window_params = [{transform_indices = @transform_0, window_bounds = array<i64: 32, 64>}, {transform_indices = @transform_1, window_bounds = array<i64: 64, 192>}, {transform_indices = @transform_2, window_bounds = array<i64: 32, 192>}]} {
    %c0_i32 = arith.constant 0 : i32
    %0 = arith.cmpi eq, %arg2, %c0_i32 : i32
    %1 = arith.extui %0 : i1 to i32
    %c0_i32_0 = arith.constant 0 : i32
    %2 = arith.cmpi ne, %1, %c0_i32_0 : i32
    scf.if %2 {
      %cst_10 = arith.constant 0.000000e+00 : f32
      %13 = vector.broadcast %cst_10 : f32 to vector<32x192xf32>
      %c0_11 = arith.constant 0 : index
      %c0_12 = arith.constant 0 : index
      %14 = vector.load %arg6[%c0_11, %c0_12] : memref<32x192xf32, #tpu.memory_space<vmem>>, vector<32x192xf32>
      tpu.vector_store %arg6[%c0_11, %c0_12], %13 {strides = array<i32>} : memref<32x192xf32, #tpu.memory_space<vmem>>, vector<32x192xf32>,
    } else {
    }
    %c0 = arith.constant 0 : index
    %c0_1 = arith.constant 0 : index
    %3 = vector.load %arg6[%c0, %c0_1] : memref<32x192xf32, #tpu.memory_space<vmem>>, vector<32x192xf32>
    %c0_2 = arith.constant 0 : index
    %c0_3 = arith.constant 0 : index
    %4 = vector.load %arg3[%c0_2, %c0_3] : memref<32x64xf32, #tpu.memory_space<vmem>>, vector<32x64xf32>
    %5 = arith.truncf %4 : vector<32x64xf32> to vector<32x64xbf16>
    %c0_4 = arith.constant 0 : index
    %c0_5 = arith.constant 0 : index
    %6 = vector.load %arg4[%c0_4, %c0_5] : memref<64x192xbf16, #tpu.memory_space<vmem>>, vector<64x192xbf16>
    %cst = arith.constant dense<0.000000e+00> : vector<32x192xf32>
    %7 = tpu.matmul %5, %6, %cst {dimension_numbers = #tpu.dot_dimension_numbers<[1], [0], [0], [1], [0, 0, 1, 1], [], []>} : vector<32x64xbf16>, vector<64x192xbf16>, vector<32x192xf32> -> vector<32x192xf32>
    %8 = arith.addf %3, %7 : vector<32x192xf32>
    %c0_6 = arith.constant 0 : index
    %c0_7 = arith.constant 0 : index
    %9 = vector.load %arg6[%c0_6, %c0_7] : memref<32x192xf32, #tpu.memory_space<vmem>>, vector<32x192xf32>
    tpu.vector_store %arg6[%c0_6, %c0_7], %8 {strides = array<i32>} : memref<32x192xf32, #tpu.memory_space<vmem>>, vector<32x192xf32>,
    %c0_i32_8 = arith.constant 0 : i32
    %10 = arith.cmpi eq, %arg2, %c0_i32_8 : i32
    %11 = arith.extui %10 : i1 to i32
    %c0_i32_9 = arith.constant 0 : i32
    %12 = arith.cmpi ne, %11, %c0_i32_9 : i32
    scf.if %12 {
      %c0_10 = arith.constant 0 : index
      %c0_11 = arith.constant 0 : index
      %13 = vector.load %arg6[%c0_10, %c0_11] : memref<32x192xf32, #tpu.memory_space<vmem>>, vector<32x192xf32>
      %c0_12 = arith.constant 0 : index
      %c0_13 = arith.constant 0 : index
      %14 = vector.load %arg5[%c0_12, %c0_13] : memref<32x192xf32, #tpu.memory_space<vmem>>, vector<32x192xf32>
      tpu.vector_store %arg5[%c0_12, %c0_13], %13 {strides = array<i32>} : memref<32x192xf32, #tpu.memory_space<vmem>>, vector<32x192xf32>,
    } else {
    }
    return
  }
  func.func @transform_0(%arg0: i32, %arg1: i32, %arg2: i32) -> (i32, i32) {
    %c0_i32 = arith.constant 0 : i32
    return %arg0, %arg2 : i32, i32
  }
  func.func @transform_1(%arg0: i32, %arg1: i32, %arg2: i32) -> (i32, i32) {
    %c0_i32 = arith.constant 0 : i32
    return %arg2, %arg1 : i32, i32
  }
  func.func @transform_2(%arg0: i32, %arg1: i32, %arg2: i32) -> (i32, i32) {
    %c0_i32 = arith.constant 0 : i32
    return %arg0, %arg1 : i32, i32
  }
}

</mosaic_0001>

<llo_original>
// kernel: tpu_custom_call.1
$region0: #{tpu_custom_call.1}
  #allocation0 [shape = 'u32[]', space=smem, size = 0x4, offset = 0x4, fixed_abs, tag = 'smem constant byte address 0x4 - core index']
  #allocation1 [shape = 'u32[72,128]{1,0:T(1,128)}', space=vmem, size = 0x9000, scoped, tag = 'internal scratch']
  #allocation2 [shape = 'f32[32,192]{1,0:T(8,128)}', space=vmem, size = 0x8000, scoped, tag = 'scratch operand']
  %s0 = inlined_call_operand.hbm [shape: f32[32,64], index: 0, kind: input, shape index: {}]
  %s1 = inlined_call_operand.hbm [shape: bf16[64,192], index: 1, kind: input, shape index: {}]
  %s2 = inlined_call_operand.hbm [shape: f32[32,192], index: 2, kind: output, shape index: {}]
  %s3 = sld [smem:[#allocation0]]
  $region34: #{tpu_custom_call.1} parent=0
    _
  %s5 = ssub.s32 1, %s3
  %s6 = scalar_select 0, %s5, %s3
  $region1: #{tpu_custom_call.1} parent=0
    #allocation3 [shape = 'u8[16384]{0}', space=vmem, size = 0x4000, scoped, tag = 'input window, operand 0, single buffered']
    #allocation4 [shape = 's32[1]{0}', space=sflag, size = 0x4, scoped, tag = 'scoped memory for tpu_custom_call.1']
    #allocation5 [shape = 's32[1]{0}', space=sflag, size = 0x4, scoped, tag = 'scoped memory for tpu_custom_call.1']
    #allocation6 [shape = 'u8[32768]{0}', space=vmem, size = 0x8000, scoped, tag = 'input window, operand 1, single buffered']
    #allocation7 [shape = 's32[1]{0}', space=sflag, size = 0x4, scoped, tag = 'scoped memory for tpu_custom_call.1']
    #allocation8 [shape = 'u8[32768]{0}', space=vmem, size = 0x8000, scoped, tag = 'output window, operand 0, single buffered']
    %7 = vsyncpa [#allocation4], 0
    %8 = vsyncpa [#allocation7], 0
    %9 = vsyncpa [#allocation5], 0
    // Predicated region
    $region2: #{tpu_custom_call.1} parent=1 // pred_check
      _
    $region3: #{tpu_custom_call.1} parent=1 // pred_check_branch
      %11 = sbr.rel (0) target = $region5
    $region4: #{tpu_custom_call.1} parent=1 // pred_region
      %13 = vsyncadd [#allocation4], 0
      %s14 = sshll.u32 %s0, 4
      %s15 = int_to_ptr.hbm [resolvable:$true] %s14
      %s16 = sshll.u32 [#allocation3], 4
      %s17 = int_to_ptr.vmem [resolvable:$true] %s16
      %22 = dma.hbm_to_vmem [thread:$0]  %s15, 512, %s17, [#allocation4], 128, 128, 8
    $region5: #{tpu_custom_call.1} parent=1 // pred_fallthru
      _
    // Predicated region
    $region6: #{tpu_custom_call.1} parent=1 // pred_check
      _
    $region7: #{tpu_custom_call.1} parent=1 // pred_check_branch
      %24 = sbr.rel (0) target = $region9
    $region8: #{tpu_custom_call.1} parent=1 // pred_region
      %26 = vsyncadd [#allocation7], 0
      %s27 = sshll.u32 %s1, 4
      %s28 = int_to_ptr.hbm [resolvable:$true] %s27
      %s29 = sshll.u32 [#allocation6], 4
      %s30 = int_to_ptr.vmem [resolvable:$true] %s29
      %35 = dma.hbm_to_vmem [thread:$0]  %s28, 1024, %s30, [#allocation7], 128, 128, 8
    $region9: #{tpu_custom_call.1} parent=1 // pred_fallthru
      _
    // Predicated region
    $region10: #{tpu_custom_call.1} parent=1 // pred_check
      _
    $region11: #{tpu_custom_call.1} parent=1 // pred_check_branch
      %37 = sbr.rel (0) target = $region13
    $region12: #{tpu_custom_call.1} parent=1 // pred_region
      %39 = dma.done [#allocation4], 512
    $region13: #{tpu_custom_call.1} parent=1 // pred_fallthru
      _
    // Predicated region
    $region14: #{tpu_custom_call.1} parent=1 // pred_check
      _
    $region15: #{tpu_custom_call.1} parent=1 // pred_check_branch
      %41 = sbr.rel (0) target = $region17
    $region16: #{tpu_custom_call.1} parent=1 // pred_region
      %43 = dma.done [#allocation7], 1024
    $region17: #{tpu_custom_call.1} parent=1 // pred_fallthru
      _
    %p45 = scmp.eq.s32.totalorder 0, 0
    // Predicated region
    $region18: #{tpu_custom_call.1} parent=1 // pred_check
      %p46 = pneg %p45
    $region19: #{tpu_custom_call.1} parent=1 // pred_check_branch
      %48 = sbr.rel (%p46) target = $region21
    $region20: #{tpu_custom_call.1} parent=1 // pred_region
      %49 = vst [vmem:[#allocation2] sm:$0xff] 0.0
      %vm50 = vcmask 523264
      %51 = vst.msk [vmem:[#allocation2 + $0x8] sm:$0xff] %vm50, 0.0
      %52 = vst [vmem:[#allocation2 + $0x10] sm:$0xff] 0.0
      %53 = vst.msk [vmem:[#allocation2 + $0x18] sm:$0xff] %vm50, 0.0
      %54 = vst [vmem:[#allocation2 + $0x20] sm:$0xff] 0.0
      %55 = vst.msk [vmem:[#allocation2 + $0x28] sm:$0xff] %vm50, 0.0
      %56 = vst [vmem:[#allocation2 + $0x30] sm:$0xff] 0.0
      %57 = vst.msk [vmem:[#allocation2 + $0x38] sm:$0xff] %vm50, 0.0
    $region21: #{tpu_custom_call.1} parent=1 // pred_fallthru
      _
    %v58 = vld [vmem:[#allocation2] sm:$0xff]
    %v59 = vld [vmem:[#allocation2 + $0x8] sm:$0xff]
    %v60 = vld [vmem:[#allocation2 + $0x10] sm:$0xff]
    %v61 = vld [vmem:[#allocation2 + $0x18] sm:$0xff]
    %v62 = vld [vmem:[#allocation2 + $0x20] sm:$0xff]
    %v63 = vld [vmem:[#allocation2 + $0x28] sm:$0xff]
    %v64 = vld [vmem:[#allocation2 + $0x30] sm:$0xff]
    %v65 = vld [vmem:[#allocation2 + $0x38] sm:$0xff]
    %v66 = vld [vmem:[#allocation3] sm:$0xff]
    %v67 = vld [vmem:[#allocation3 + $0x8] sm:$0xff]
    %v68 = vld [vmem:[#allocation3 + $0x10] sm:$0xff]
    %v69 = vld [vmem:[#allocation3 + $0x18] sm:$0xff]
    %v70 = vpack.c.bf16 %v67, %v66
    %v71 = vpack.c.bf16 %v69, %v68
    %v72 = vld [vmem:[#allocation6] sm:$0xff]
    %v73 = vld [vmem:[#allocation6 + $0x8] sm:$0xff]
    %v74 = vld [vmem:[#allocation6 + $0x10] sm:$0xff]
    %v75 = vld [vmem:[#allocation6 + $0x18] sm:$0xff]
    %v76 = vld [vmem:[#allocation6 + $0x20] sm:$0xff]
    %v77 = vld [vmem:[#allocation6 + $0x28] sm:$0xff]
    %v78 = vld [vmem:[#allocation6 + $0x30] sm:$0xff]
    %v79 = vld [vmem:[#allocation6 + $0x38] sm:$0xff]
    %v88 = vunpack.c.l.b16 %v72
    %v89 = vunpack.c.h.b16 %v72
    %v90 = vunpack.c.l.b16 %v73
    %v91 = vunpack.c.h.b16 %v73
    %v92 = vunpack.c.l.b16 %v74
    %v93 = vunpack.c.h.b16 %v74
    %v94 = vunpack.c.l.b16 %v75
    %v95 = vunpack.c.h.b16 %v75
    %v96 = vunpack.c.l.b16 %v76
    %v97 = vunpack.c.h.b16 %v76
    %v98 = vunpack.c.l.b16 %v77
    %v99 = vunpack.c.h.b16 %v77
    %v100 = vunpack.c.l.b16 %v78
    %v101 = vunpack.c.h.b16 %v78
    %v102 = vunpack.c.l.b16 %v79
    %v103 = vunpack.c.h.b16 %v79
    %v104 = vpack.c.b16 %v90, %v88
    %v105 = vpack.c.b16 %v91, %v89
    %v106 = vpack.c.b16 %v94, %v92
    %v107 = vpack.c.b16 %v95, %v93
    %v108 = vpack.c.b16 %v98, %v96
    %v109 = vpack.c.b16 %v99, %v97
    %v110 = vpack.c.b16 %v102, %v100
    %v111 = vpack.c.b16 %v103, %v101
    %vm120 = vcmask 523264
    %v122 = vsel %vm120, %v70, 0
    %v125 = vsel %vm120, %v71, 0
    %127 = vmatpush.bf16.msra.mxu0 0
    %128 = vmatpush.bf16.msra.mxu0 0
    %129 = vmatpush.bf16.msra.mxu0 0
    %130 = vmatpush.bf16.msra.mxu0 0
    %131 = vmatpush.bf16.msra.mxu0 %v110
    %132 = vmatpush.bf16.msra.mxu0 %v108
    %133 = vmatpush.bf16.msra.mxu0 %v106
    %134 = vmatpush.bf16.msra.mxu0 %v104
    %135 = vmatmul.bf16.gmra.mxu0 %v122
    %v136 = vpop.f32.mrf.mxu0
    %v137 = vadd.f32 0.0, %v136
    %v138 = vpop.f32.mrf.mxu0
    %v139 = vadd.f32 0.0, %v138
    %140 = vmatmul.bf16.gmra.mxu0 %v125
    %v141 = vpop.f32.mrf.mxu0
    %v142 = vadd.f32 0.0, %v141
    %v143 = vpop.f32.mrf.mxu0
    %v144 = vadd.f32 0.0, %v143
    %145 = vdwg.mxu0
    %146 = vmatpush.bf16.msra.mxu0 0
    %147 = vmatpush.bf16.msra.mxu0 0
    %148 = vmatpush.bf16.msra.mxu0 0
    %149 = vmatpush.bf16.msra.mxu0 0
    %150 = vmatpush.bf16.msra.mxu0 %v111
    %151 = vmatpush.bf16.msra.mxu0 %v109
    %152 = vmatpush.bf16.msra.mxu0 %v107
    %153 = vmatpush.bf16.msra.mxu0 %v105
    %154 = vmatmul.bf16.gmra.mxu0 %v122
    %v155 = vpop.f32.mrf.mxu0
    %v156 = vadd.f32 0.0, %v155
    %v157 = vpop.f32.mrf.mxu0
    %v158 = vadd.f32 0.0, %v157
    %159 = vmatmul.bf16.gmra.mxu0 %v125
    %v160 = vpop.f32.mrf.mxu0
    %v161 = vadd.f32 0.0, %v160
    %v162 = vpop.f32.mrf.mxu0
    %v163 = vadd.f32 0.0, %v162
    %164 = vdwg.mxu0
    %v165 = vadd.f32 %v58, %v137
    %v166 = vadd.f32 %v59, %v156
    %v167 = vadd.f32 %v60, %v139
    %v168 = vadd.f32 %v61, %v158
    %v169 = vadd.f32 %v62, %v142
    %v170 = vadd.f32 %v63, %v161
    %v171 = vadd.f32 %v64, %v144
    %v172 = vadd.f32 %v65, %v163
    %173 = vst [vmem:[#allocation2] sm:$0xff] %v165
    %174 = vst.msk [vmem:[#allocation2 + $0x8] sm:$0xff] %vm120, %v166
    %175 = vst [vmem:[#allocation2 + $0x10] sm:$0xff] %v167
    %176 = vst.msk [vmem:[#allocation2 + $0x18] sm:$0xff] %vm120, %v168
    %177 = vst [vmem:[#allocation2 + $0x20] sm:$0xff] %v169
    %178 = vst.msk [vmem:[#allocation2 + $0x28] sm:$0xff] %vm120, %v170
    %179 = vst [vmem:[#allocation2 + $0x30] sm:$0xff] %v171
    %180 = vst.msk [vmem:[#allocation2 + $0x38] sm:$0xff] %vm120, %v172
    // Predicated region
    $region22: #{tpu_custom_call.1} parent=1 // pred_check
      %p181 = pneg %p45
    $region23: #{tpu_custom_call.1} parent=1 // pred_check_branch
      %183 = sbr.rel (%p181) target = $region25
    $region24: #{tpu_custom_call.1} parent=1 // pred_region
      %v184 = vld [vmem:[#allocation2] sm:$0xff]
      %v185 = vld [vmem:[#allocation2 + $0x8] sm:$0xff]
      %v186 = vld [vmem:[#allocation2 + $0x10] sm:$0xff]
      %v187 = vld [vmem:[#allocation2 + $0x18] sm:$0xff]
      %v188 = vld [vmem:[#allocation2 + $0x20] sm:$0xff]
      %v189 = vld [vmem:[#allocation2 + $0x28] sm:$0xff]
      %v190 = vld [vmem:[#allocation2 + $0x30] sm:$0xff]
      %v191 = vld [vmem:[#allocation2 + $0x38] sm:$0xff]
      %192 = vst [vmem:[#allocation8] sm:$0xff] %v184
      %193 = vst.msk [vmem:[#allocation8 + $0x8] sm:$0xff] %vm120, %v185
      %194 = vst [vmem:[#allocation8 + $0x10] sm:$0xff] %v186
      %195 = vst.msk [vmem:[#allocation8 + $0x18] sm:$0xff] %vm120, %v187
      %196 = vst [vmem:[#allocation8 + $0x20] sm:$0xff] %v188
      %197 = vst.msk [vmem:[#allocation8 + $0x28] sm:$0xff] %vm120, %v189
      %198 = vst [vmem:[#allocation8 + $0x30] sm:$0xff] %v190
      %199 = vst.msk [vmem:[#allocation8 + $0x38] sm:$0xff] %vm120, %v191
    $region25: #{tpu_custom_call.1} parent=1 // pred_fallthru
      _
    // Predicated region
    $region26: #{tpu_custom_call.1} parent=1 // pred_check
      _
    $region27: #{tpu_custom_call.1} parent=1 // pred_check_branch
      %201 = sbr.rel (0) target = $region29
    $region28: #{tpu_custom_call.1} parent=1 // pred_region
      %203 = vsyncadd [#allocation5], 0
      %s204 = sshll.u32 [#allocation8], 4
      %s205 = int_to_ptr.vmem [resolvable:$true] %s204
      %s206 = sshll.u32 %s2, 4
      %s207 = int_to_ptr.hbm [resolvable:$true] %s206
      %212 = dma.vmem_to_hbm [thread:$0]  %s205, 1024, %s207, [#allocation5], 256, 256, 16
    $region29: #{tpu_custom_call.1} parent=1 // pred_fallthru
      _
    // Predicated region
    $region30: #{tpu_custom_call.1} parent=1 // pred_check
      _
    $region31: #{tpu_custom_call.1} parent=1 // pred_check_branch
      %214 = sbr.rel (0) target = $region33
    $region32: #{tpu_custom_call.1} parent=1 // pred_region
      %216 = dma.done [#allocation5], 1024
    $region33: #{tpu_custom_call.1} parent=1 // pred_fallthru
      _
    %217 = vsyncpa [#allocation4], 1
    %218 = vsyncpa [#allocation7], 1
    %219 = vsyncpa [#allocation5], 1

</llo_original>
